<compile_context>
chip_gen: v7x
topology: tpu7x:2x2x1
jax: 0.10.0
libtpu: 0.0.40
codegen_flags: <defaults>
</compile_context>

<pallas_src>
import jax
import jax.numpy as jnp
from jax.experimental import pallas as pl
from jax.experimental.pallas import tpu as pltpu


def feat_attention_kernel(
    feat_ref,     # (TB, F, H)
    target_ref,   # (TB, E)   target_emb with the singleton dim squeezed
    w_af_ref,     # (H, E)    att_feat.weight, pre-transposed
    w_at_ref,     # (E, E)    att_target.weight, pre-transposed
    w_top_ref,    # (H, E)    top_linear.weight, pre-transposed
    vecs_ref,     # (3, E)    rows: [b_af, w_al, b_top]
    out_ref,      # (TB, E)
):
    tb, F, H = feat_ref.shape
    E = w_af_ref.shape[1]

    feat = feat_ref[...]                      # (TB, F, H)
    # Free only because F == 8 matches the sublane tile; other F values would
    # turn this into a VMEM relayout (perf, not correctness).
    feat2d = feat.reshape(tb * F, H)          # (TB*F, H)
    tgt = target_ref[...]                     # (TB, E)

    vecs = vecs_ref[...]                      # (3, E)
    b_af = vecs[0]                            # (E,)
    w_al = vecs[1]                            # (E,)
    b_top = vecs[2]                           # (E,)

    # att_feat(feat_emb): one fused (TB*F, H) @ (H, E) MXU matmul.
    # Its bias b_af is folded into target_att below (cheaper: (TB, E) add
    # instead of a (TB, F, E) add).
    feat_att = jnp.dot(feat2d, w_af_ref[...], preferred_element_type=jnp.float32)
    feat_att = feat_att.reshape(tb, F, E)                     # (TB, F, E)

    # att_target(target_emb) + b_af: small (TB, E) work, broadcast over F once.
    target_att = (
        jnp.dot(tgt, w_at_ref[...], preferred_element_type=jnp.float32) + b_af
    )                                                          # (TB, E)

    z = jnp.maximum(feat_att + target_att[:, None, :], 0.0)   # (TB, F, E)

    # att_layer (out_features = 1): VPU multiply + lane reduce instead of an
    # N=1 MXU pass.  Scalar bias b_al is dropped (softmax shift invariance).
    logits = jnp.sum(z * w_al, axis=-1)                        # (TB, F)

    # Softmax over the feature axis (exact divide; EUP/VPU are not the
    # bottleneck, so no approx reciprocal needed).
    m = jnp.max(logits, axis=-1, keepdims=True)
    e = jnp.exp(logits - m)
    att_w = e / jnp.sum(e, axis=-1, keepdims=True)             # (TB, F)

    # (att_weight * feat_emb).sum(1): VPU multiply + sublane reduce (no M=1
    # matmul).  dropout(p=0) is the identity.
    att_out = jnp.sum(att_w[:, :, None] * feat, axis=1)        # (TB, H)

    # top_linear: (TB, H) @ (H, E) + b.
    feature = (
        jnp.dot(att_out, w_top_ref[...], preferred_element_type=jnp.float32)
        + b_top
    )
    out_ref[...] = feature.astype(out_ref.dtype)


def _round_up(x, m):
    return ((x + m - 1) // m) * m


def feat_attention(feat_emb, target_emb, params, *, tb_max=1024):
    """feat_emb: (B, F, H), target_emb: (B, 1, E) -> (B, E)."""
    B, F, H = feat_emb.shape
    E = params["w_af"].shape[0]

    # Squeeze the singleton sequence dim: keeps the target/output blocks 2-D
    # and lane-dense, avoiding the (tb, 1, E) -> (8, 128) tile-padding blowup.
    target2d = target_emb.reshape(B, E)

    # Pre-transpose weights once (PyTorch Linear stores (out, in)) so the MXU
    # consumes them directly with no per-step XLU transposes.
    w_af_t = params["w_af"].T        # (H, E)
    w_at_t = params["w_at"].T        # (E, E)
    w_top_t = params["w_top"].T      # (H, E)
    # Pack the small per-E vectors into a single (3, E) slab -> one DMA/tile.
    vecs = jnp.concatenate(
        [
            params["b_af"].reshape(1, E),
            params["w_al"].reshape(1, E),
            params["b_top"].reshape(1, E),
        ],
        axis=0,
    )
    # params["b_al"] is deliberately not passed: adding a constant to every
    # logit before softmax does not change the softmax output (exact).

    # Batch blocking: blocks as large as VMEM allows (amortize the ~0.35us
    # per-grid-step overhead), but keep >= 2 grid steps when B allows so the
    # pipeline can overlap prefetch with compute and the "parallel" axis can
    # shard across v7x's two TensorCores.  tb is a multiple of 8 so the
    # (tb, E) blocks satisfy the sublane-divisibility rule when grid > 1.
    if B <= 16:
        tb = B                                   # single full block
    else:
        n_blocks = max(2, pl.cdiv(B, tb_max))
        tb = min(tb_max, _round_up(pl.cdiv(B, n_blocks), 8))
    b_pad = _round_up(B, tb)

    if b_pad != B:
        pad = b_pad - B
        feat_emb = jnp.pad(feat_emb, ((0, pad), (0, 0), (0, 0)))
        target2d = jnp.pad(target2d, ((0, pad), (0, 0)))

    # Scoped-VMEM budget: per batch row (lane-padded to 128) the double-
    # buffered feat block + target/out blocks + the (TB, F, E)-sized
    # temporaries come to ~24 KB.  Keep headroom, but stay well under v7x's
    # 64 MiB physical per core (v5e/v6e have 128 MiB physical).
    vmem_limit = int(min(48 << 20, max(32 << 20, tb * 24 * 1024 + (4 << 20))))

    grid_spec = pltpu.PrefetchScalarGridSpec(
        num_scalar_prefetch=0,
        grid=(b_pad // tb,),
        in_specs=[
            pl.BlockSpec((tb, F, H), lambda i: (i, 0, 0)),   # feat_emb
            pl.BlockSpec((tb, E), lambda i: (i, 0)),         # target_emb (squeezed)
            pl.BlockSpec((H, E), lambda i: (0, 0)),          # w_af^T
            pl.BlockSpec((E, E), lambda i: (0, 0)),          # w_at^T
            pl.BlockSpec((H, E), lambda i: (0, 0)),          # w_top^T
            pl.BlockSpec((3, E), lambda i: (0, 0)),          # [b_af; w_al; b_top]
        ],
        out_specs=pl.BlockSpec((tb, E), lambda i: (i, 0)),
    )

    out = pl.pallas_call(
        feat_attention_kernel,
        out_shape=jax.ShapeDtypeStruct((b_pad, E), feat_emb.dtype),
        grid_spec=grid_spec,
        compiler_params=pltpu.CompilerParams(
            dimension_semantics=("parallel",),
            vmem_limit_bytes=vmem_limit,
        ),
    )(feat_emb, target2d, w_af_t, w_at_t, w_top_t, vecs)

    return out[:B]


def reference_jax(feat_emb, target_emb, params):
    """Pure-JAX reference mirroring the PyTorch forward."""
    feat_att = jnp.einsum("bfh,eh->bfe", feat_emb, params["w_af"]) + params["b_af"]
    target_att = jnp.einsum("bse,de->bsd", target_emb, params["w_at"])
    z = jax.nn.relu(feat_att + target_att)
    logits = jnp.einsum("bfe,oe->bfo", z, params["w_al"]) + params["b_al"]
    att_w = jax.nn.softmax(logits, axis=1)                   # (B, F, 1)
    att_out = jnp.sum(att_w * feat_emb, axis=1)              # (B, H)
    return jnp.einsum("bh,eh->be", att_out, params["w_top"]) + params["b_top"]


def init_params(key, embedding_dim, hidden_dim):
    ks = jax.random.split(key, 6)
    scale = 0.05
    return {
        "w_af": scale * jax.random.normal(ks[0], (embedding_dim, hidden_dim), jnp.float32),
        "b_af": scale * jax.random.normal(ks[1], (1, embedding_dim), jnp.float32),
        "w_at": scale * jax.random.normal(ks[2], (embedding_dim, embedding_dim), jnp.float32),
        "w_al": scale * jax.random.normal(ks[3], (1, embedding_dim), jnp.float32),
        "b_al": scale * jax.random.normal(ks[4], (1, 1), jnp.float32),
        "w_top": scale * jax.random.normal(ks[5], (embedding_dim, hidden_dim), jnp.float32),
        "b_top": jnp.zeros((1, embedding_dim), jnp.float32),
    }


if __name__ == "__main__":
    F, H, E = 8, 64, 32   # num feature fields, hidden_dim (=64 in spec), embedding_dim

    key = jax.random.PRNGKey(0)
    k_feat, k_tgt, k_param = jax.random.split(key, 3)
    params = init_params(k_param, E, H)

    # Tolerance covers default-precision differences between the reference
    # einsums and the in-kernel MXU matmuls (softmax divide is now exact).
    ATOL = RTOL = 2e-3

    # Small single-block case (grid = 1, tb == B).
    B1 = 4
    feat1 = jax.random.normal(k_feat, (B1, F, H), jnp.float32)
    tgt1 = jax.random.normal(k_tgt, (B1, 1, E), jnp.float32)
    out1 = jax.block_until_ready(feat_attention(feat1, tgt1, params))
    ref1 = reference_jax(feat1, tgt1, params)
    assert out1.shape == (B1, E)
    assert jnp.allclose(out1, ref1, atol=ATOL, rtol=RTOL), "mismatch (small case)"

    # Default-path case: B > 16 splits into >= 2 blocks automatically.
    B2 = 40
    feat2 = jax.random.normal(jax.random.fold_in(k_feat, 1), (B2, F, H), jnp.float32)
    tgt2 = jax.random.normal(jax.random.fold_in(k_tgt, 1), (B2, 1, E), jnp.float32)
    out2 = jax.block_until_ready(feat_attention(feat2, tgt2, params))
    ref2 = reference_jax(feat2, tgt2, params)
    assert out2.shape == (B2, E)
    assert jnp.allclose(out2, ref2, atol=ATOL, rtol=RTOL), "mismatch (default blocking)"

    # Multi-block case with batch padding (exercises grid = 3 + padding path).
    B3 = 300
    feat3 = jax.random.normal(jax.random.fold_in(k_feat, 2), (B3, F, H), jnp.float32)
    tgt3 = jax.random.normal(jax.random.fold_in(k_tgt, 2), (B3, 1, E), jnp.float32)
    out3 = jax.block_until_ready(feat_attention(feat3, tgt3, params, tb_max=128))
    ref3 = reference_jax(feat3, tgt3, params)
    assert out3.shape == (B3, E)
    assert jnp.allclose(out3, ref3, atol=ATOL, rtol=RTOL), "mismatch (blocked case)"

    print("KERNEL_OK")
</pallas_src>

<mosaic_0001>
module attributes {stable_mosaic.version = 11 : i64} {
  func.func @feat_attention_kernel(%arg0: i32, %arg1: memref<4x8x64xf32, #tpu.memory_space<vmem>>, %arg2: memref<4x32xf32, #tpu.memory_space<vmem>>, %arg3: memref<64x32xf32, #tpu.memory_space<vmem>>, %arg4: memref<32x32xf32, #tpu.memory_space<vmem>>, %arg5: memref<64x32xf32, #tpu.memory_space<vmem>>, %arg6: memref<3x32xf32, #tpu.memory_space<vmem>>, %arg7: memref<4x32xf32, #tpu.memory_space<vmem>>) attributes {dimension_semantics = [#tpu.dimension_semantics<parallel>], iteration_bounds = array<i64: 1>, scalar_prefetch = 0 : i64, scratch_operands = 0 : i64, tpu.core_type = #tpu.core_type<tc>, window_params = [{transform_indices = @transform_0, window_bounds = array<i64: 4, 8, 64>}, {transform_indices = @transform_1, window_bounds = array<i64: 4, 32>}, {pipeline_mode = #tpu.pipeline_mode<synchronous>, transform_indices = @transform_2, window_bounds = array<i64: 64, 32>}, {pipeline_mode = #tpu.pipeline_mode<synchronous>, transform_indices = @transform_3, window_bounds = array<i64: 32, 32>}, {pipeline_mode = #tpu.pipeline_mode<synchronous>, transform_indices = @transform_4, window_bounds = array<i64: 64, 32>}, {pipeline_mode = #tpu.pipeline_mode<synchronous>, transform_indices = @transform_5, window_bounds = array<i64: 3, 32>}, {transform_indices = @transform_6, window_bounds = array<i64: 4, 32>}]} {
    %c0 = arith.constant 0 : index
    %c0_0 = arith.constant 0 : index
    %c0_1 = arith.constant 0 : index
    %0 = vector.load %arg1[%c0, %c0_0, %c0_1] : memref<4x8x64xf32, #tpu.memory_space<vmem>>, vector<4x8x64xf32>
    %1 = vector.shape_cast %0 : vector<4x8x64xf32> to vector<32x64xf32>
    %c0_2 = arith.constant 0 : index
    %c0_3 = arith.constant 0 : index
    %2 = vector.load %arg2[%c0_2, %c0_3] : memref<4x32xf32, #tpu.memory_space<vmem>>, vector<4x32xf32>
    %c0_4 = arith.constant 0 : index
    %c0_5 = arith.constant 0 : index
    %3 = vector.load %arg6[%c0_4, %c0_5] : memref<3x32xf32, #tpu.memory_space<vmem>>, vector<3x32xf32>
    %4 = vector.extract_strided_slice %3 {offsets = [0, 0], sizes = [1, 32], strides = [1, 1]} : vector<3x32xf32> to vector<1x32xf32>
    %5 = vector.shape_cast %4 : vector<1x32xf32> to vector<32xf32>
    %6 = vector.extract_strided_slice %3 {offsets = [1, 0], sizes = [1, 32], strides = [1, 1]} : vector<3x32xf32> to vector<1x32xf32>
    %7 = vector.shape_cast %6 : vector<1x32xf32> to vector<32xf32>
    %8 = vector.extract_strided_slice %3 {offsets = [2, 0], sizes = [1, 32], strides = [1, 1]} : vector<3x32xf32> to vector<1x32xf32>
    %9 = vector.shape_cast %8 : vector<1x32xf32> to vector<32xf32>
    %c0_6 = arith.constant 0 : index
    %c0_7 = arith.constant 0 : index
    %10 = vector.load %arg3[%c0_6, %c0_7] : memref<64x32xf32, #tpu.memory_space<vmem>>, vector<64x32xf32>
    %cst = arith.constant dense<0.000000e+00> : vector<32x32xf32>
    %11 = tpu.matmul %1, %10, %cst {dimension_numbers = #tpu.dot_dimension_numbers<[1], [0], [0], [1], [0, 0, 1, 1], [], []>} : vector<32x64xf32>, vector<64x32xf32>, vector<32x32xf32> -> vector<32x32xf32>
    %12 = vector.shape_cast %11 : vector<32x32xf32> to vector<4x8x32xf32>
    %c0_8 = arith.constant 0 : index
    %c0_9 = arith.constant 0 : index
    %13 = vector.load %arg4[%c0_8, %c0_9] : memref<32x32xf32, #tpu.memory_space<vmem>>, vector<32x32xf32>
    %cst_10 = arith.constant dense<0.000000e+00> : vector<4x32xf32>
    %14 = tpu.matmul %2, %13, %cst_10 {dimension_numbers = #tpu.dot_dimension_numbers<[1], [0], [0], [1], [0, 0, 1, 1], [], []>} : vector<4x32xf32>, vector<32x32xf32>, vector<4x32xf32> -> vector<4x32xf32>
    %15 = vector.shape_cast %5 : vector<32xf32> to vector<1x32xf32>
    %16 = vector.broadcast %15 : vector<1x32xf32> to vector<4x32xf32>
    %17 = arith.addf %14, %16 : vector<4x32xf32>
    %18 = vector.shape_cast %17 : vector<4x32xf32> to vector<4x1x32xf32>
    %19 = vector.broadcast %18 : vector<4x1x32xf32> to vector<4x8x32xf32>
    %20 = arith.addf %12, %19 : vector<4x8x32xf32>
    %cst_11 = arith.constant 0.000000e+00 : f32
    %21 = vector.broadcast %cst_11 : f32 to vector<4x8x32xf32>
    %22 = arith.maximumf %20, %21 : vector<4x8x32xf32>
    %23 = vector.shape_cast %7 : vector<32xf32> to vector<1x1x32xf32>
    %24 = vector.broadcast %23 : vector<1x1x32xf32> to vector<4x8x32xf32>
    %25 = arith.mulf %22, %24 : vector<4x8x32xf32>
    %cst_12 = arith.constant dense<0.000000e+00> : vector<4x8xf32>
    %26 = vector.multi_reduction <add>, %25, %cst_12 [2] : vector<4x8x32xf32> to vector<4x8xf32>
    %cst_13 = arith.constant dense<0xFF800000> : vector<4xf32>
    %27 = vector.multi_reduction <maximumf>, %26, %cst_13 [1] : vector<4x8xf32> to vector<4xf32>
    %28 = vector.shape_cast %27 : vector<4xf32> to vector<4x1xf32>
    %29 = vector.broadcast %28 : vector<4x1xf32> to vector<4x8xf32>
    %30 = arith.subf %26, %29 : vector<4x8xf32>
    %31 = math.exp %30 : vector<4x8xf32>
    %cst_14 = arith.constant dense<0.000000e+00> : vector<4xf32>
    %32 = vector.multi_reduction <add>, %31, %cst_14 [1] : vector<4x8xf32> to vector<4xf32>
    %33 = vector.shape_cast %32 : vector<4xf32> to vector<4x1xf32>
    %34 = vector.broadcast %33 : vector<4x1xf32> to vector<4x8xf32>
    %35 = arith.divf %31, %34 : vector<4x8xf32>
    %36 = vector.shape_cast %35 : vector<4x8xf32> to vector<4x8x1xf32>
    %37 = vector.broadcast %36 : vector<4x8x1xf32> to vector<4x8x64xf32>
    %38 = arith.mulf %37, %0 : vector<4x8x64xf32>
    %cst_15 = arith.constant dense<0.000000e+00> : vector<4x64xf32>
    %39 = vector.multi_reduction <add>, %38, %cst_15 [1] : vector<4x8x64xf32> to vector<4x64xf32>
    %c0_16 = arith.constant 0 : index
    %c0_17 = arith.constant 0 : index
    %40 = vector.load %arg5[%c0_16, %c0_17] : memref<64x32xf32, #tpu.memory_space<vmem>>, vector<64x32xf32>
    %cst_18 = arith.constant dense<0.000000e+00> : vector<4x32xf32>
    %41 = tpu.matmul %39, %40, %cst_18 {dimension_numbers = #tpu.dot_dimension_numbers<[1], [0], [0], [1], [0, 0, 1, 1], [], []>} : vector<4x64xf32>, vector<64x32xf32>, vector<4x32xf32> -> vector<4x32xf32>
    %42 = vector.shape_cast %9 : vector<32xf32> to vector<1x32xf32>
    %43 = vector.broadcast %42 : vector<1x32xf32> to vector<4x32xf32>
    %44 = arith.addf %41, %43 : vector<4x32xf32>
    %c0_19 = arith.constant 0 : index
    %c0_20 = arith.constant 0 : index
    %45 = vector.load %arg7[%c0_19, %c0_20] : memref<4x32xf32, #tpu.memory_space<vmem>>, vector<4x32xf32>
    tpu.vector_store %arg7[%c0_19, %c0_20], %44 {strides = array<i32>} : memref<4x32xf32, #tpu.memory_space<vmem>>, vector<4x32xf32>,
    return
  }
  func.func @transform_0(%arg0: i32) -> (i32, i32, i32) {
    %c0_i32 = arith.constant 0 : i32
    %c0_i32_0 = arith.constant 0 : i32
    %c0_i32_1 = arith.constant 0 : i32
    return %arg0, %c0_i32, %c0_i32_0 : i32, i32, i32
  }
  func.func @transform_1(%arg0: i32) -> (i32, i32) {
    %c0_i32 = arith.constant 0 : i32
    %c0_i32_0 = arith.constant 0 : i32
    return %arg0, %c0_i32 : i32, i32
  }
  func.func @transform_2(%arg0: i32) -> (i32, i32) {
    %c0_i32 = arith.constant 0 : i32
    %c0_i32_0 = arith.constant 0 : i32
    %c0_i32_1 = arith.constant 0 : i32
    return %c0_i32, %c0_i32_0 : i32, i32
  }
  func.func @transform_3(%arg0: i32) -> (i32, i32) {
    %c0_i32 = arith.constant 0 : i32
    %c0_i32_0 = arith.constant 0 : i32
    %c0_i32_1 = arith.constant 0 : i32
    return %c0_i32, %c0_i32_0 : i32, i32
  }
  func.func @transform_4(%arg0: i32) -> (i32, i32) {
    %c0_i32 = arith.constant 0 : i32
    %c0_i32_0 = arith.constant 0 : i32
    %c0_i32_1 = arith.constant 0 : i32
    return %c0_i32, %c0_i32_0 : i32, i32
  }
  func.func @transform_5(%arg0: i32) -> (i32, i32) {
    %c0_i32 = arith.constant 0 : i32
    %c0_i32_0 = arith.constant 0 : i32
    %c0_i32_1 = arith.constant 0 : i32
    return %c0_i32, %c0_i32_0 : i32, i32
  }
  func.func @transform_6(%arg0: i32) -> (i32, i32) {
    %c0_i32 = arith.constant 0 : i32
    %c0_i32_0 = arith.constant 0 : i32
    return %arg0, %c0_i32 : i32, i32
  }
}

</mosaic_0001>

<llo_original>
// kernel: tpu_custom_call.1
$region0: #{tpu_custom_call.1}
  #allocation0 [shape = 'u32[]', space=smem, size = 0x4, offset = 0x4, fixed_abs, tag = 'smem constant byte address 0x4 - core index']
  #allocation1 [shape = 'u32[144,128]{1,0:T(1,128)}', space=vmem, size = 0x12000, scoped, tag = 'internal scratch']
  %s0 = inlined_call_operand.vmem [shape: f32[4,8,64], index: 0, kind: input, shape index: {}]
  %s1 = inlined_call_operand.vmem [shape: f32[4,32], index: 1, kind: input, shape index: {}]
  %s2 = inlined_call_operand.vmem [shape: f32[64,32], index: 2, kind: input, shape index: {}]
  %s3 = inlined_call_operand.vmem [shape: f32[32,32], index: 3, kind: input, shape index: {}]
  %s4 = inlined_call_operand.vmem [shape: f32[64,32], index: 4, kind: input, shape index: {}]
  %s5 = inlined_call_operand.vmem [shape: f32[3,32], index: 5, kind: input, shape index: {}]
  %s6 = inlined_call_operand.hbm [shape: f32[4,32], index: 6, kind: output, shape index: {}]
  %s7 = sld [smem:[#allocation0]]
  $region34: #{tpu_custom_call.1} parent=0
    _
  %s9 = ssub.s32 1, %s7
  %s10 = scalar_select 0, %s9, %s7
  $region1: #{tpu_custom_call.1} parent=0
    #allocation2 [shape = 'u8[2048]{0}', space=vmem, size = 0x800, scoped, tag = 'output window, operand 0, single buffered']
    #allocation3 [shape = 's32[1]{0}', space=sflag, size = 0x4, scoped, tag = 'scoped memory for tpu_custom_call.1']
    %11 = vsyncpa [#allocation3], 0
    // Predicated region
    $region2: #{tpu_custom_call.1} parent=1 // pred_check
      _
    $region3: #{tpu_custom_call.1} parent=1 // pred_check_branch
      %13 = sbr.rel (0) target = $region5
    $region4: #{tpu_custom_call.1} parent=1 // pred_region
      _
    $region5: #{tpu_custom_call.1} parent=1 // pred_fallthru
      _
    // Predicated region
    $region6: #{tpu_custom_call.1} parent=1 // pred_check
      _
    $region7: #{tpu_custom_call.1} parent=1 // pred_check_branch
      %15 = sbr.rel (0) target = $region9
    $region8: #{tpu_custom_call.1} parent=1 // pred_region
      _
    $region9: #{tpu_custom_call.1} parent=1 // pred_fallthru
      _
    // Predicated region
    $region10: #{tpu_custom_call.1} parent=1 // pred_check
      _
    $region11: #{tpu_custom_call.1} parent=1 // pred_check_branch
      %17 = sbr.rel (0) target = $region13
    $region12: #{tpu_custom_call.1} parent=1 // pred_region
      _
    $region13: #{tpu_custom_call.1} parent=1 // pred_fallthru
      _
    // Predicated region
    $region14: #{tpu_custom_call.1} parent=1 // pred_check
      _
    $region15: #{tpu_custom_call.1} parent=1 // pred_check_branch
      %19 = sbr.rel (0) target = $region17
    $region16: #{tpu_custom_call.1} parent=1 // pred_region
      _
    $region17: #{tpu_custom_call.1} parent=1 // pred_fallthru
      _
    // Predicated region
    $region18: #{tpu_custom_call.1} parent=1 // pred_check
      _
    $region19: #{tpu_custom_call.1} parent=1 // pred_check_branch
      %21 = sbr.rel (0) target = $region21
    $region20: #{tpu_custom_call.1} parent=1 // pred_region
      _
    $region21: #{tpu_custom_call.1} parent=1 // pred_fallthru
      _
    // Predicated region
    $region22: #{tpu_custom_call.1} parent=1 // pred_check
      _
    $region23: #{tpu_custom_call.1} parent=1 // pred_check_branch
      %23 = sbr.rel (0) target = $region25
    $region24: #{tpu_custom_call.1} parent=1 // pred_region
      _
    $region25: #{tpu_custom_call.1} parent=1 // pred_fallthru
      _
    %v24 = vld [vmem:[%s0] sm:$0xff]
    %v25 = vld [vmem:[%s0 + $0x8] sm:$0xff]
    %v26 = vld [vmem:[%s0 + $0x10] sm:$0xff]
    %v27 = vld [vmem:[%s0 + $0x18] sm:$0xff]
    %v28 = vld [vmem:[%s1] sm:$0xf]
    %v29 = vld [vmem:[%s5] sm:$0x7]
    %v30 = vld [vmem:[%s2] sm:$0xff]
    %v31 = vld [vmem:[%s2 + $0x8] sm:$0xff]
    %v32 = vld [vmem:[%s2 + $0x10] sm:$0xff]
    %v33 = vld [vmem:[%s2 + $0x18] sm:$0xff]
    %v34 = vld [vmem:[%s2 + $0x20] sm:$0xff]
    %v35 = vld [vmem:[%s2 + $0x28] sm:$0xff]
    %v36 = vld [vmem:[%s2 + $0x30] sm:$0xff]
    %v37 = vld [vmem:[%s2 + $0x38] sm:$0xff]
    %vm38 = vcmask 523264
    %v40 = vsel %vm38, %v24, 0
    %v43 = vsel %vm38, %v25, 0
    %v46 = vsel %vm38, %v26, 0
    %v49 = vsel %vm38, %v27, 0
    %51 = vmatprep.subr.mxu0 0.0
    %52 = vmatpush1.msra.mxu0 %v30
    %53 = vmatprep.subr.mxu0 0.0
    %54 = vmatpush1.msra.mxu0 %v31
    %55 = vmatprep.subr.mxu0 0.0
    %56 = vmatpush1.msra.mxu0 %v32
    %57 = vmatprep.subr.mxu0 0.0
    %58 = vmatpush1.msra.mxu0 %v33
    %59 = vmatprep.subr.mxu0 0.0
    %60 = vmatpush1.msra.mxu0 %v34
    %61 = vmatprep.subr.mxu0 0.0
    %62 = vmatpush1.msra.mxu0 %v35
    %63 = vmatprep.subr.mxu0 0.0
    %64 = vmatpush1.msra.mxu0 %v36
    %65 = vmatprep.subr.mxu0 0.0
    %66 = vmatpush1.msra.mxu0 %v37
    %67 = vmatprep.subr.mxu0 0.0
    %68 = vmatpush1.msra.mxu0 0.0
    %69 = vmatprep.subr.mxu0 0.0
    %70 = vmatpush1.msra.mxu0 0.0
    %71 = vmatprep.subr.mxu0 0.0
    %72 = vmatpush1.msra.mxu0 0.0
    %73 = vmatprep.subr.mxu0 0.0
    %74 = vmatpush1.msra.mxu0 0.0
    %75 = vmatprep.subr.mxu0 0.0
    %76 = vmatpush1.msra.mxu0 0.0
    %77 = vmatprep.subr.mxu0 0.0
    %78 = vmatpush1.msra.mxu0 0.0
    %79 = vmatprep.subr.mxu0 0.0
    %80 = vmatpush1.msra.mxu0 0.0
    %81 = vmatprep.subr.mxu0 0.0
    %82 = vmatpush1.msra.mxu0 0.0
    %83 = vmatprep.subr.mxu0 0.0
    %84 = vmatpush1.msra.mxu0 0.0
    %85 = vmatprep.subr.mxu0 0.0
    %86 = vmatpush1.msra.mxu0 0.0
    %87 = vmatprep.subr.mxu0 0.0
    %88 = vmatpush1.msra.mxu0 0.0
    %89 = vmatprep.subr.mxu0 0.0
    %90 = vmatpush1.msra.mxu0 0.0
    %91 = vmatprep.subr.mxu0 0.0
    %92 = vmatpush1.msra.mxu0 0.0
    %93 = vmatprep.subr.mxu0 0.0
    %94 = vmatpush1.msra.mxu0 0.0
    %95 = vmatprep.subr.mxu0 0.0
    %96 = vmatpush1.msra.mxu0 0.0
    %97 = vmatprep.subr.mxu0 0.0
    %98 = vmatpush1.msra.mxu0 0.0
    %99 = vmatprep.subr.mxu0 0.0
    %100 = vmatpush1.msra.mxu0 0.0
    %101 = vmatprep.subr.mxu0 0.0
    %102 = vmatpush1.msra.mxu0 0.0
    %103 = vmatprep.subr.mxu0 0.0
    %104 = vmatpush1.msra.mxu0 0.0
    %105 = vmatprep.subr.mxu0 0.0
    %106 = vmatpush1.msra.mxu0 0.0
    %107 = vmatprep.subr.mxu0 0.0
    %108 = vmatpush1.msra.mxu0 0.0
    %109 = vmatprep.subr.mxu0 0.0
    %110 = vmatpush1.msra.mxu0 0.0
    %111 = vmatprep.subr.mxu0 0.0
    %112 = vmatpush1.msra.mxu0 0.0
    %113 = vmatprep.subr.mxu0 0.0
    %114 = vmatpush1.msra.mxu0 0.0
    %115 = vmatprep.mubr.f32.mxu0 0.0
    %116 = vmatmul.mubr.f32.gmra.mrb[0].mxu0 %v40
    %v117 = vpop.f32.mrb[0].mxu0
    %v118 = vadd.f32 0.0, %v117
    %v119 = vpop.f32.mrb[0].mxu0
    %120 = vmatprep.mubr.f32.mxu0 0.0
    %121 = vmatmul.mubr.f32.gmra.mrb[0].mxu0 %v43
    %v122 = vpop.f32.mrb[0].mxu0
    %v123 = vadd.f32 0.0, %v122
    %v124 = vpop.f32.mrb[0].mxu0
    %125 = vmatprep.mubr.f32.mxu0 0.0
    %126 = vmatmul.mubr.f32.gmra.mrb[0].mxu0 %v46
    %v127 = vpop.f32.mrb[0].mxu0
    %v128 = vadd.f32 0.0, %v127
    %v129 = vpop.f32.mrb[0].mxu0
    %130 = vmatprep.mubr.f32.mxu0 0.0
    %131 = vmatmul.mubr.f32.gmra.mrb[0].mxu0 %v49
    %v132 = vpop.f32.mrb[0].mxu0
    %v133 = vadd.f32 0.0, %v132
    %v134 = vpop.f32.mrb[0].mxu0
    %135 = vdwg.mxu0
    %v136 = vld [vmem:[%s3] sm:$0xff]
    %v137 = vld [vmem:[%s3 + $0x8] sm:$0xff]
    %v138 = vld [vmem:[%s3 + $0x10] sm:$0xff]
    %v139 = vld [vmem:[%s3 + $0x18] sm:$0xff]
    %v140 = vlaneseq
    %v141 = vshrl.u32 %v140, 7
    %v142 = vsub.s32 0, %v141
    %v143 = vrot.slane %v29, %v142
    %vm144 = vcmask 261120
    %v146 = vsel %vm144, %v28, 0
    %148 = vmatprep.subr.mxu0 0.0
    %149 = vmatpush1.msra.mxu0 %v136
    %150 = vmatprep.subr.mxu0 0.0
    %151 = vmatpush1.msra.mxu0 %v137
    %152 = vmatprep.subr.mxu0 0.0
    %153 = vmatpush1.msra.mxu0 %v138
    %154 = vmatprep.subr.mxu0 0.0
    %155 = vmatpush1.msra.mxu0 %v139
    %156 = vmatprep.subr.mxu0 0.0
    %157 = vmatpush1.msra.mxu0 0.0
    %158 = vmatprep.subr.mxu0 0.0
    %159 = vmatpush1.msra.mxu0 0.0
    %160 = vmatprep.subr.mxu0 0.0
    %161 = vmatpush1.msra.mxu0 0.0
    %162 = vmatprep.subr.mxu0 0.0
    %163 = vmatpush1.msra.mxu0 0.0
    %164 = vmatprep.subr.mxu0 0.0
    %165 = vmatpush1.msra.mxu0 0.0
    %166 = vmatprep.subr.mxu0 0.0
    %167 = vmatpush1.msra.mxu0 0.0
    %168 = vmatprep.subr.mxu0 0.0
    %169 = vmatpush1.msra.mxu0 0.0
    %170 = vmatprep.subr.mxu0 0.0
    %171 = vmatpush1.msra.mxu0 0.0
    %172 = vmatprep.subr.mxu0 0.0
    %173 = vmatpush1.msra.mxu0 0.0
    %174 = vmatprep.subr.mxu0 0.0
    %175 = vmatpush1.msra.mxu0 0.0
    %176 = vmatprep.subr.mxu0 0.0
    %177 = vmatpush1.msra.mxu0 0.0
    %178 = vmatprep.subr.mxu0 0.0
    %179 = vmatpush1.msra.mxu0 0.0
    %180 = vmatprep.subr.mxu0 0.0
    %181 = vmatpush1.msra.mxu0 0.0
    %182 = vmatprep.subr.mxu0 0.0
    %183 = vmatpush1.msra.mxu0 0.0
    %184 = vmatprep.subr.mxu0 0.0
    %185 = vmatpush1.msra.mxu0 0.0
    %186 = vmatprep.subr.mxu0 0.0
    %187 = vmatpush1.msra.mxu0 0.0
    %188 = vmatprep.subr.mxu0 0.0
    %189 = vmatpush1.msra.mxu0 0.0
    %190 = vmatprep.subr.mxu0 0.0
    %191 = vmatpush1.msra.mxu0 0.0
    %192 = vmatprep.subr.mxu0 0.0
    %193 = vmatpush1.msra.mxu0 0.0
    %194 = vmatprep.subr.mxu0 0.0
    %195 = vmatpush1.msra.mxu0 0.0
    %196 = vmatprep.subr.mxu0 0.0
    %197 = vmatpush1.msra.mxu0 0.0
    %198 = vmatprep.subr.mxu0 0.0
    %199 = vmatpush1.msra.mxu0 0.0
    %200 = vmatprep.subr.mxu0 0.0
    %201 = vmatpush1.msra.mxu0 0.0
    %202 = vmatprep.subr.mxu0 0.0
    %203 = vmatpush1.msra.mxu0 0.0
    %204 = vmatprep.subr.mxu0 0.0
    %205 = vmatpush1.msra.mxu0 0.0
    %206 = vmatprep.subr.mxu0 0.0
    %207 = vmatpush1.msra.mxu0 0.0
    %208 = vmatprep.subr.mxu0 0.0
    %209 = vmatpush1.msra.mxu0 0.0
    %210 = vmatprep.subr.mxu0 0.0
    %211 = vmatpush1.msra.mxu0 0.0
    %212 = vmatprep.mubr.f32.mxu0 0.0
    %213 = vmatmul.mubr.f32.gmra.mrb[0].mxu0 %v146
    %v214 = vpop.f32.mrb[0].mxu0
    %v215 = vadd.f32 %v143, %v214
    %v216 = vpop.f32.mrb[0].mxu0
    %217 = vdwg.mxu0
    %v220 = vunpack.c.l.s4 1966171168
    %v221 = vunpack.c.0.s8 %v220
    %v222 = vlaneseq
    %v223 = vshrl.u32 %v222, 7
    %v224 = vsub.s32 %v221, %v223
    %v225 = vrot.slane %v215, %v224
    %v226 = vcombine.high %v225, %v225
    %v228 = vunpack.c.l.s4 1966171168
    %v229 = vunpack.c.0.s8 %v228
    %v230 = vlaneseq
    %v231 = vshrl.u32 %v230, 7
    %v232 = vsub.s32 %v229, %v231
    %v233 = vrot.slane %v225, %v232
    %v235 = vunpack.c.l.s4 1966171168
    %v236 = vunpack.c.0.s8 %v235
    %v237 = vlaneseq
    %v238 = vshrl.u32 %v237, 7
    %v239 = vsub.s32 %v236, %v238
    %v240 = vrot.slane %v226, %v239
    %v241 = vcombine.high %v233, %v233
    %v242 = vcombine.high %v240, %v240
    %v243 = vlaneseq
    %v244 = vshrl.u32 %v243, 7
    %v245 = vsub.s32 0, %v244
    %v246 = vrot.slane %v233, %v245
    %v247 = vlaneseq
    %v248 = vshrl.u32 %v247, 7
    %v249 = vsub.s32 0, %v248
    %v250 = vrot.slane %v240, %v249
    %v251 = vlaneseq
    %v252 = vshrl.u32 %v251, 7
    %v253 = vsub.s32 0, %v252
    %v254 = vrot.slane %v241, %v253
    %v255 = vlaneseq
    %v256 = vshrl.u32 %v255, 7
    %v257 = vsub.s32 0, %v256
    %v258 = vrot.slane %v242, %v257
    %v263 = vadd.f32 %v118, %v246
    %v264 = vadd.f32 %v123, %v250
    %v265 = vadd.f32 %v128, %v254
    %v266 = vadd.f32 %v133, %v258
    %v267 = vmax.f32 %v263, 0.0
    %v268 = vmax.f32 %v264, 0.0
    %v269 = vmax.f32 %v265, 0.0
    %v270 = vmax.f32 %v266, 0.0
    %v271 = vlaneseq
    %v272 = vshrl.u32 %v271, 7
    %v273 = vsub.s32 1, %v272
    %v274 = vrot.slane %v29, %v273
    %v275 = vmul.f32 %v267, %v274
    %v276 = vmul.f32 %v268, %v274
    %v277 = vmul.f32 %v269, %v274
    %v278 = vmul.f32 %v270, %v274
    %v279 = vsel %vm144, %v275, 0.0
    %280 = vadd.xlane.f32.xlu0 %v279
    %v281 = vpop.xlane.xlu0 %280
    %v282 = vsel %vm144, %v276, 0.0
    %283 = vadd.xlane.f32.xlu0 %v282
    %v284 = vpop.xlane.xlu0 %283
    %v285 = vsel %vm144, %v277, 0.0
    %286 = vadd.xlane.f32.xlu0 %v285
    %v287 = vpop.xlane.xlu0 %286
    %v288 = vsel %vm144, %v278, 0.0
    %289 = vadd.xlane.f32.xlu0 %v288
    %v290 = vpop.xlane.xlu0 %289
    %v295 = vlaneseq
    %v296 = vand.u32 %v295, 127
    %v297 = vlaneseq
    %v298 = vshrl.u32 %v297, 7
    %v299 = vsub.s32 %v296, %v298
    %v300 = vrot.slane %v281, %v299
    %v301 = vlaneseq
    %v302 = vshrl.u32 %v301, 7
    %v303 = vsub.s32 %v296, %v302
    %v304 = vrot.slane %v284, %v303
    %v305 = vlaneseq
    %v306 = vshrl.u32 %v305, 7
    %v307 = vsub.s32 %v296, %v306
    %v308 = vrot.slane %v287, %v307
    %v309 = vlaneseq
    %v310 = vshrl.u32 %v309, 7
    %v311 = vsub.s32 %v296, %v310
    %v312 = vrot.slane %v290, %v311
    %vm313 = vcmask 1041409
    %v314 = vsel %vm313, %v304, %v300
    %vm315 = vcmask 1042434
    %v316 = vsel %vm315, %v308, %v314
    %vm317 = vcmask 1043459
    %v318 = vsel %vm317, %v312, %v316
    %vm320 = vcmask 60416
    %v321 = vsel %vm320, %v318, -inf
    %322 = vmax.xlane.f32.xlu0 %v321
    %v323 = vpop.xlane.xlu0 %322
    %v325 = vlaneseq
    %v326 = vshrl.u32 %v325, 7
    %v327 = vsub.s32 0, %v326
    %v328 = vrot.slane %v323, %v327
    %v329 = vlaneseq
    %v330 = vshrl.u32 %v329, 7
    %v331 = vsub.s32 1, %v330
    %v332 = vrot.slane %v323, %v331
    %v333 = vlaneseq
    %v334 = vshrl.u32 %v333, 7
    %v335 = vsub.s32 2, %v334
    %v336 = vrot.slane %v323, %v335
    %v337 = vlaneseq
    %v338 = vshrl.u32 %v337, 7
    %v339 = vsub.s32 3, %v338
    %v340 = vrot.slane %v323, %v339
    %v345 = vsub.f32 %v281, %v328
    %v346 = vsub.f32 %v284, %v332
    %v347 = vsub.f32 %v287, %v336
    %v348 = vsub.f32 %v290, %v340
    %v349 = vmul.f32 %v345, 1.442695
    %v350 = vpow.pop %v349
    %v351 = vmul.f32 %v346, 1.442695
    %v352 = vpow.pop %v351
    %v353 = vmul.f32 %v347, 1.442695
    %v354 = vpow.pop %v353
    %v355 = vmul.f32 %v348, 1.442695
    %v356 = vpow.pop %v355
    %361 = vset.pattern.permute.xlu0 0
    %362 = vperm.xlu0 %361, %v350
    %v363 = vpop.permute.xlu0 %362
    %364 = vset.pattern.permute.xlu0 0
    %365 = vperm.xlu0 %364, %v352
    %v366 = vpop.permute.xlu0 %365
    %367 = vset.pattern.permute.xlu0 0
    %368 = vperm.xlu0 %367, %v354
    %v369 = vpop.permute.xlu0 %368
    %370 = vset.pattern.permute.xlu0 0
    %371 = vperm.xlu0 %370, %v356
    %v372 = vpop.permute.xlu0 %371
    %v373 = vlaneseq
    %v374 = vshrl.u32 %v373, 7
    %v375 = vsub.s32 %v296, %v374
    %v376 = vrot.slane %v363, %v375
    %v377 = vlaneseq
    %v378 = vshrl.u32 %v377, 7
    %v379 = vsub.s32 %v296, %v378
    %v380 = vrot.slane %v366, %v379
    %v381 = vlaneseq
    %v382 = vshrl.u32 %v381, 7
    %v383 = vsub.s32 %v296, %v382
    %v384 = vrot.slane %v369, %v383
    %v385 = vlaneseq
    %v386 = vshrl.u32 %v385, 7
    %v387 = vsub.s32 %v296, %v386
    %v388 = vrot.slane %v372, %v387
    %v389 = vsel %vm313, %v380, %v376
    %v390 = vsel %vm315, %v384, %v389
    %v391 = vsel %vm317, %v388, %v390
    %v393 = vsel %vm320, %v391, 0.0
    %394 = vadd.xlane.f32.xlu0 %v393
    %v395 = vpop.xlane.xlu0 %394
    %v397 = vlaneseq
    %v398 = vshrl.u32 %v397, 7
    %v399 = vsub.s32 0, %v398
    %v400 = vrot.slane %v395, %v399
    %v401 = vlaneseq
    %v402 = vshrl.u32 %v401, 7
    %v403 = vsub.s32 1, %v402
    %v404 = vrot.slane %v395, %v403
    %v405 = vlaneseq
    %v406 = vshrl.u32 %v405, 7
    %v407 = vsub.s32 2, %v406
    %v408 = vrot.slane %v395, %v407
    %v409 = vlaneseq
    %v410 = vshrl.u32 %v409, 7
    %v411 = vsub.s32 3, %v410
    %v412 = vrot.slane %v395, %v411
    %v417 = vrcp.pop %v400
    %v418 = vmul.f32 %v350, %v417
    %v419 = vrcp.pop %v404
    %v420 = vmul.f32 %v352, %v419
    %v421 = vrcp.pop %v408
    %v422 = vmul.f32 %v354, %v421
    %v423 = vrcp.pop %v412
    %v424 = vmul.f32 %v356, %v423
    %426 = vset.pattern.permute.xlu0 0
    %427 = vperm.xlu0 %426, %v418
    %v428 = vpop.permute.xlu0 %427
    %431 = vset.pattern.permute.xlu0 0
    %432 = vperm.xlu0 %431, %v420
    %v433 = vpop.permute.xlu0 %432
    %436 = vset.pattern.permute.xlu0 0
    %437 = vperm.xlu0 %436, %v422
    %v438 = vpop.permute.xlu0 %437
    %441 = vset.pattern.permute.xlu0 0
    %442 = vperm.xlu0 %441, %v424
    %v443 = vpop.permute.xlu0 %442
    %v445 = vmul.f32 %v428, %v24
    %v446 = vmul.f32 %v433, %v25
    %v447 = vmul.f32 %v438, %v26
    %v448 = vmul.f32 %v443, %v27
    %v449 = vsel %vm38, %v445, 0.0
    %v450 = vrot.slane %v449, 4
    %v451 = vadd.f32 %v449, %v450
    %v452 = vrot.slane %v451, 2
    %v453 = vadd.f32 %v451, %v452
    %v454 = vrot.slane %v453, 1
    %v455 = vadd.f32 %v453, %v454
    %v456 = vsel %vm38, %v446, 0.0
    %v457 = vrot.slane %v456, 4
    %v458 = vadd.f32 %v456, %v457
    %v459 = vrot.slane %v458, 2
    %v460 = vadd.f32 %v458, %v459
    %v461 = vrot.slane %v460, 1
    %v462 = vadd.f32 %v460, %v461
    %v463 = vsel %vm38, %v447, 0.0
    %v464 = vrot.slane %v463, 4
    %v465 = vadd.f32 %v463, %v464
    %v466 = vrot.slane %v465, 2
    %v467 = vadd.f32 %v465, %v466
    %v468 = vrot.slane %v467, 1
    %v469 = vadd.f32 %v467, %v468
    %v470 = vsel %vm38, %v448, 0.0
    %v471 = vrot.slane %v470, 4
    %v472 = vadd.f32 %v470, %v471
    %v473 = vrot.slane %v472, 2
    %v474 = vadd.f32 %v472, %v473
    %v475 = vrot.slane %v474, 1
    %v476 = vadd.f32 %v474, %v475
    %v477 = vld [vmem:[%s4] sm:$0xff]
    %v478 = vld [vmem:[%s4 + $0x8] sm:$0xff]
    %v479 = vld [vmem:[%s4 + $0x10] sm:$0xff]
    %v480 = vld [vmem:[%s4 + $0x18] sm:$0xff]
    %v481 = vld [vmem:[%s4 + $0x20] sm:$0xff]
    %v482 = vld [vmem:[%s4 + $0x28] sm:$0xff]
    %v483 = vld [vmem:[%s4 + $0x30] sm:$0xff]
    %v484 = vld [vmem:[%s4 + $0x38] sm:$0xff]
    %v485 = vlaneseq
    %v486 = vshrl.u32 %v485, 7
    %v487 = vsub.s32 2, %v486
    %v488 = vrot.slane %v29, %v487
    %v493 = vsel %vm313, %v462, %v455
    %v494 = vsel %vm315, %v469, %v493
    %v495 = vsel %vm317, %v476, %v494
    %v496 = vsel %vm38, %v495, 0
    %498 = vmatprep.subr.mxu0 0.0
    %499 = vmatpush1.msra.mxu0 %v477
    %500 = vmatprep.subr.mxu0 0.0
    %501 = vmatpush1.msra.mxu0 %v478
    %502 = vmatprep.subr.mxu0 0.0
    %503 = vmatpush1.msra.mxu0 %v479
    %504 = vmatprep.subr.mxu0 0.0
    %505 = vmatpush1.msra.mxu0 %v480
    %506 = vmatprep.subr.mxu0 0.0
    %507 = vmatpush1.msra.mxu0 %v481
    %508 = vmatprep.subr.mxu0 0.0
    %509 = vmatpush1.msra.mxu0 %v482
    %510 = vmatprep.subr.mxu0 0.0
    %511 = vmatpush1.msra.mxu0 %v483
    %512 = vmatprep.subr.mxu0 0.0
    %513 = vmatpush1.msra.mxu0 %v484
    %514 = vmatprep.subr.mxu0 0.0
    %515 = vmatpush1.msra.mxu0 0.0
    %516 = vmatprep.subr.mxu0 0.0
    %517 = vmatpush1.msra.mxu0 0.0
    %518 = vmatprep.subr.mxu0 0.0
    %519 = vmatpush1.msra.mxu0 0.0
    %520 = vmatprep.subr.mxu0 0.0
    %521 = vmatpush1.msra.mxu0 0.0
    %522 = vmatprep.subr.mxu0 0.0
    %523 = vmatpush1.msra.mxu0 0.0
    %524 = vmatprep.subr.mxu0 0.0
    %525 = vmatpush1.msra.mxu0 0.0
    %526 = vmatprep.subr.mxu0 0.0
    %527 = vmatpush1.msra.mxu0 0.0
    %528 = vmatprep.subr.mxu0 0.0
    %529 = vmatpush1.msra.mxu0 0.0
    %530 = vmatprep.subr.mxu0 0.0
    %531 = vmatpush1.msra.mxu0 0.0
    %532 = vmatprep.subr.mxu0 0.0
    %533 = vmatpush1.msra.mxu0 0.0
    %534 = vmatprep.subr.mxu0 0.0
    %535 = vmatpush1.msra.mxu0 0.0
    %536 = vmatprep.subr.mxu0 0.0
    %537 = vmatpush1.msra.mxu0 0.0
    %538 = vmatprep.subr.mxu0 0.0
    %539 = vmatpush1.msra.mxu0 0.0
    %540 = vmatprep.subr.mxu0 0.0
    %541 = vmatpush1.msra.mxu0 0.0
    %542 = vmatprep.subr.mxu0 0.0
    %543 = vmatpush1.msra.mxu0 0.0
    %544 = vmatprep.subr.mxu0 0.0
    %545 = vmatpush1.msra.mxu0 0.0
    %546 = vmatprep.subr.mxu0 0.0
    %547 = vmatpush1.msra.mxu0 0.0
    %548 = vmatprep.subr.mxu0 0.0
    %549 = vmatpush1.msra.mxu0 0.0
    %550 = vmatprep.subr.mxu0 0.0
    %551 = vmatpush1.msra.mxu0 0.0
    %552 = vmatprep.subr.mxu0 0.0
    %553 = vmatpush1.msra.mxu0 0.0
    %554 = vmatprep.subr.mxu0 0.0
    %555 = vmatpush1.msra.mxu0 0.0
    %556 = vmatprep.subr.mxu0 0.0
    %557 = vmatpush1.msra.mxu0 0.0
    %558 = vmatprep.subr.mxu0 0.0
    %559 = vmatpush1.msra.mxu0 0.0
    %560 = vmatprep.subr.mxu0 0.0
    %561 = vmatpush1.msra.mxu0 0.0
    %562 = vmatprep.mubr.f32.mxu0 0.0
    %563 = vmatmul.mubr.f32.gmra.mrb[0].mxu0 %v496
    %v564 = vpop.f32.mrb[0].mxu0
    %v565 = vadd.f32 %v488, %v564
    %v566 = vpop.f32.mrb[0].mxu0
    %567 = vdwg.mxu0
    %vm568 = vcmask 257024
    %569 = vst.msk [vmem:[#allocation2] sm:$0xf] %vm568, %v565
    // Predicated region
    $region26: #{tpu_custom_call.1} parent=1 // pred_check
      _
    $region27: #{tpu_custom_call.1} parent=1 // pred_check_branch
      %571 = sbr.rel (0) target = $region29
    $region28: #{tpu_custom_call.1} parent=1 // pred_region
      %s573 = ssub.s32 64, 64
      %574 = vsyncadd [#allocation3], %s573
      %s576 = sshll.u32 [#allocation2], 4
      %s577 = int_to_ptr.vmem [resolvable:$true] %s576
      %579 = dma.vmem_to_hbm [thread:$0]  %s577, 64, %s6, [#allocation3]
    $region29: #{tpu_custom_call.1} parent=1 // pred_fallthru
      _
    // Predicated region
    $region30: #{tpu_custom_call.1} parent=1 // pred_check
      _
    $region31: #{tpu_custom_call.1} parent=1 // pred_check_branch
      %581 = sbr.rel (0) target = $region33
    $region32: #{tpu_custom_call.1} parent=1 // pred_region
      %582 = dma.done [#allocation3], 64
    $region33: #{tpu_custom_call.1} parent=1 // pred_fallthru
      _
    %583 = vsyncpa [#allocation3], 1

</llo_original>
